<compile_context>
chip_gen: v7x
topology: tpu7x:2x2x1
jax: 0.10.0
libtpu: 0.0.40
codegen_flags: <defaults>
</compile_context>

<pallas_src>
import functools

import jax
import jax.numpy as jnp
import numpy as np
from jax.experimental import pallas as pl
from jax.experimental.pallas import tpu as pltpu


def _round_up(x, m):
    return ((x + m - 1) // m) * m


def _als_kernel(h_ref, w_ref, b_ref, tgt_ref, out_ref, *,
                shortlist, n_classes, n_clusters, cutoffs):
    """Per-row adaptive-softmax NLL for one row tile.

    h_ref:   (TM, D)     compute_dtype  hidden rows (padding rows are zero)
    w_ref:   (D, Cp)     compute_dtype  [weight.T | cluster_weight.T | 0-pad]
    b_ref:   (1, Cp)     f32            [bias     | cluster_bias     | 0-pad]
    tgt_ref: (TM, 1)     i32            targets
    out_ref: (TM, 128)   f32            per-row NLL broadcast across lanes
    """
    # Single fused MXU matmul for head + every tail cluster; f32 accumulation.
    logits = jnp.dot(h_ref[...], w_ref[...],
                     preferred_element_type=jnp.float32) + b_ref[...]
    n_rows, c_pad = logits.shape
    col = jax.lax.broadcasted_iota(jnp.int32, (n_rows, c_pad), 1)
    neg_big = jnp.float32(-1e30)
    c_tot = n_classes + n_clusters

    # --- segment masks -------------------------------------------------------
    # Head segment = shortlist columns + the cluster columns at the end of the
    # combined layout; tail cluster i = columns [cutoff[i-1], cutoff[i]).
    cutoff_values = (0,) + tuple(cutoffs)            # (0, c0, ..., n_classes)
    head_mask = (col < shortlist) | ((col >= n_classes) & (col < c_tot))
    cluster_masks = [(col >= cutoff_values[i]) & (col < cutoff_values[i + 1])
                     for i in range(1, n_clusters + 1)]

    # --- per-segment maxes ---------------------------------------------------
    def seg_max(mask):
        return jnp.max(jnp.where(mask, logits, neg_big), axis=-1, keepdims=True)

    m_head = seg_max(head_mask)
    m_clusters = [seg_max(m) for m in cluster_masks]

    # Per-column shift = the max of the segment that column belongs to.
    # Padded columns (>= c_tot) keep shift 0: their exp stays finite and they
    # are excluded from every masked sum below, so they are numerically inert.
    shift = jnp.where(head_mask, m_head, jnp.float32(0.0))
    for mask_i, m_i in zip(cluster_masks, m_clusters):
        shift = jnp.where(mask_i, m_i, shift)

    # --- ONE exp pass over the whole tile (EUP) ------------------------------
    e = jnp.exp(logits - shift)

    def seg_logz(mask, m):
        s = jnp.sum(jnp.where(mask, e, 0.0), axis=-1, keepdims=True)
        return m + jnp.log(s)                                     # [TM, 1]

    logz_head = seg_logz(head_mask, m_head)

    # --- data-dependent target-column gather (keep the masked-sum form) ------
    t = tgt_ref[...]                                              # [TM, 1] i32
    # TODO(synk): out-of-range targets (t >= n_classes) silently yield a wrong
    # finite NLL here; PyTorch would raise instead.
    logit_t = jnp.sum(jnp.where(col == t, logits, 0.0),
                      axis=-1, keepdims=True)                     # [TM, 1]

    # Bucket 0 (shortlist targets): head log-prob at the target column.
    logprob = logit_t - logz_head

    for i in range(1, n_clusters + 1):                            # static tiny loop
        l_idx, h_idx = cutoff_values[i], cutoff_values[i + 1]
        in_bucket = (t >= l_idx) & (t < h_idx)                    # [TM, 1]
        logz_i = seg_logz(cluster_masks[i - 1], m_clusters[i - 1])
        # PyTorch quirk: head_logprob[:, -i] == combined column n_classes+n_clusters-i.
        ccol = n_classes + n_clusters - i
        cluster_logit = logits[:, ccol:ccol + 1]                  # static lane slice
        lp_i = (cluster_logit - logz_head) + (logit_t - logz_i)
        logprob = jnp.where(in_bucket, lp_i, logprob)

    # Lane-dense output store: broadcast the NLL column across 128 lanes so the
    # store is an unmasked vst (wrapper reads lane 0).
    out_ref[...] = jnp.broadcast_to(-logprob, out_ref.shape)


def pack_adaptive_softmax_weights(weight, bias, cluster_weight, cluster_bias,
                                  cutoffs, compute_dtype=jnp.bfloat16):
    """One-time weight packing, hoisted out of the per-call path.

    weight [n_classes, D], bias [n_classes], cluster_weight [n_clusters, D],
    cluster_bias [n_clusters], cutoffs ascending list (< n_classes).
    Returns (w_all [D, Cp], b_all [1, Cp], meta).
    """
    n_classes, d = weight.shape
    cutoffs_full = list(cutoffs) + [n_classes]
    shortlist = cutoffs_full[0]
    n_clusters = len(cutoffs_full) - 1
    c_tot = n_classes + n_clusters
    c_pad = _round_up(c_tot, 128)                 # lane-dense matmul output

    w_all = jnp.zeros((d, c_pad), compute_dtype)
    w_all = w_all.at[:, :n_classes].set(weight.T.astype(compute_dtype))
    w_all = w_all.at[:, n_classes:c_tot].set(cluster_weight.T.astype(compute_dtype))
    b_all = jnp.zeros((1, c_pad), jnp.float32)
    b_all = b_all.at[0, :n_classes].set(bias.astype(jnp.float32))
    b_all = b_all.at[0, n_classes:c_tot].set(cluster_bias.astype(jnp.float32))

    meta = dict(shortlist=shortlist, n_classes=n_classes, n_clusters=n_clusters,
                cutoffs=tuple(cutoffs_full), c_pad=c_pad, in_features=d)
    return w_all, b_all, meta


def adaptive_log_softmax_packed(hidden, target, w_all, b_all, meta,
                                keep_order=False):
    """Forward with pre-packed weights. hidden [N, D], target [N] int."""
    n, d = hidden.shape
    c_pad = meta["c_pad"]
    compute_dtype = w_all.dtype

    # Row tiling: each grid step handles one TM-row block; "parallel" lets v7x
    # split the row axis over its two TensorCores and gives DMA/compute
    # pipelining on all generations for non-trivial N.
    n8 = _round_up(max(n, 8), 8)
    tm = 256 if n8 >= 256 else n8
    n_pad = _round_up(n8, tm)

    h_p = jnp.zeros((n_pad, d), compute_dtype).at[:n].set(
        hidden.astype(compute_dtype))
    t_p = jnp.zeros((n_pad, 1), jnp.int32).at[:n, 0].set(
        target.astype(jnp.int32))

    kernel = functools.partial(
        _als_kernel, shortlist=meta["shortlist"], n_classes=meta["n_classes"],
        n_clusters=meta["n_clusters"], cutoffs=meta["cutoffs"])

    nll_wide = pl.pallas_call(
        kernel,
        out_shape=jax.ShapeDtypeStruct((n_pad, 128), jnp.float32),
        grid=(n_pad // tm,),
        in_specs=[
            pl.BlockSpec((tm, d), lambda i: (i, 0)),      # hidden row tile
            pl.BlockSpec((d, c_pad), lambda i: (0, 0)),   # packed weights (shared)
            pl.BlockSpec((1, c_pad), lambda i: (0, 0)),   # packed bias (shared)
            pl.BlockSpec((tm, 1), lambda i: (i, 0)),      # target row tile
        ],
        out_specs=pl.BlockSpec((tm, 128), lambda i: (i, 0)),
        compiler_params=pltpu.CompilerParams(
            dimension_semantics=("parallel",)),
    )(h_p, w_all, b_all, t_p)

    nll = nll_wide[:n, 0]
    if keep_order:
        return nll

    # keep_order=False (module default): PyTorch writes each bucket's results
    # consecutively in ascending original-index order == gather by a stable
    # argsort of the bucket id (composite-key trick guarantees stability).
    # TODO(synk): this data-dependent compaction stays in the wrapper (N scalars).
    cutoffs_full = meta["cutoffs"]
    boundaries = jnp.asarray(cutoffs_full[:-1], jnp.int32)
    bucket = jnp.sum(target[:, None].astype(jnp.int32) >= boundaries[None, :],
                     axis=1).astype(jnp.int32)
    perm = jnp.argsort(bucket * n + jnp.arange(n, dtype=jnp.int32))
    return nll[perm]


def adaptive_log_softmax(hidden, target, weight, bias, cluster_weight,
                         cluster_bias, cutoffs, keep_order=False,
                         compute_dtype=jnp.float32):
    """Convenience path that packs weights per call (prefer the packed API)."""
    packed = pack_adaptive_softmax_weights(weight, bias, cluster_weight,
                                           cluster_bias, cutoffs, compute_dtype)
    return adaptive_log_softmax_packed(hidden, target, *packed,
                                       keep_order=keep_order)


def _reference(hidden, target, weight, bias, cluster_weight, cluster_bias,
               cutoffs, keep_order=False):
    """Pure-JAX replica of the PyTorch AdaptiveLogSoftmax.forward."""
    n, d = hidden.shape
    n_classes = weight.shape[0]
    cutoffs_full = list(cutoffs) + [n_classes]
    shortlist = cutoffs_full[0]

    head_w = jnp.concatenate([weight[:shortlist], cluster_weight], axis=0)
    head_b = jnp.concatenate([bias[:shortlist], cluster_bias], axis=0)
    head_logprob = jax.nn.log_softmax(hidden @ head_w.T + head_b, axis=1)

    per = jnp.zeros((n,), hidden.dtype)
    cutoff_values = [0] + cutoffs_full
    for i in range(len(cutoff_values) - 1):
        l_idx, h_idx = cutoff_values[i], cutoff_values[i + 1]
        mask = (target >= l_idx) & (target < h_idx)
        if i == 0:
            idx = jnp.clip(target, 0, shortlist - 1)
            lp = jnp.take_along_axis(head_logprob, idx[:, None], axis=1)[:, 0]
        else:
            w_i = weight[l_idx:h_idx]
            b_i = bias[l_idx:h_idx]
            tail_logprob = jax.nn.log_softmax(hidden @ w_i.T + b_i, axis=1)
            t_i = jnp.clip(target - l_idx, 0, h_idx - l_idx - 1)
            lp = head_logprob[:, -i] + jnp.take_along_axis(
                tail_logprob, t_i[:, None], axis=1)[:, 0]
        per = jnp.where(mask, -lp, per)

    if keep_order:
        return per
    boundaries = jnp.asarray(cutoffs_full[:-1], jnp.int32)
    bucket = jnp.sum(target[:, None].astype(jnp.int32) >= boundaries[None, :],
                     axis=1).astype(jnp.int32)
    perm = jnp.argsort(bucket * n + jnp.arange(n, dtype=jnp.int32))
    return per[perm]


if __name__ == "__main__":
    # Small shapes consistent with the module:
    # in_features=32, n_classes=32, cutoffs=[8, 16]
    #   => shortlist=8, n_clusters=2, head_size=10; batch N=16.
    N, D = 16, 32
    n_classes = 32
    cutoffs = [8, 16]
    n_clusters = len(cutoffs)

    key = jax.random.PRNGKey(0)
    k1, k2, k3, k4, k5, k6 = jax.random.split(key, 6)

    hidden = jax.random.normal(k1, (N, D), dtype=jnp.float32)
    target = jax.random.randint(k2, (N,), 0, n_classes, dtype=jnp.int32)
    weight = jax.random.normal(k3, (n_classes, D), dtype=jnp.float32) / np.sqrt(D)
    bias = 0.1 * jax.random.normal(k4, (n_classes,), dtype=jnp.float32)
    cluster_weight = (jax.random.normal(k5, (n_clusters, D), dtype=jnp.float32)
                      / np.sqrt(D))
    cluster_bias = 0.1 * jax.random.normal(k6, (n_clusters,), dtype=jnp.float32)

    # --- f32 path: tight check against the pure-JAX reference ---------------
    packed_f32 = pack_adaptive_softmax_weights(
        weight, bias, cluster_weight, cluster_bias, cutoffs,
        compute_dtype=jnp.float32)

    out = jax.block_until_ready(adaptive_log_softmax_packed(
        hidden, target, *packed_f32, keep_order=False))
    ref = _reference(hidden, target, weight, bias, cluster_weight, cluster_bias,
                     cutoffs, keep_order=False)
    np.testing.assert_allclose(np.asarray(out), np.asarray(ref),
                               rtol=1e-4, atol=1e-4)

    out_k = jax.block_until_ready(adaptive_log_softmax_packed(
        hidden, target, *packed_f32, keep_order=True))
    ref_k = _reference(hidden, target, weight, bias, cluster_weight,
                       cluster_bias, cutoffs, keep_order=True)
    np.testing.assert_allclose(np.asarray(out_k), np.asarray(ref_k),
                               rtol=1e-4, atol=1e-4)

    # --- bf16 production path: MXU-friendly, looser tolerance ---------------
    packed_bf16 = pack_adaptive_softmax_weights(
        weight, bias, cluster_weight, cluster_bias, cutoffs,
        compute_dtype=jnp.bfloat16)
    out_b = jax.block_until_ready(adaptive_log_softmax_packed(
        hidden, target, *packed_bf16, keep_order=False))
    np.testing.assert_allclose(np.asarray(out_b), np.asarray(ref),
                               rtol=5e-2, atol=5e-2)

    print("KERNEL_OK")
</pallas_src>

<mosaic_0001>
module attributes {stable_mosaic.version = 11 : i64} {
  func.func @_als_kernel(%arg0: i32, %arg1: memref<16x32xf32, #tpu.memory_space<vmem>>, %arg2: memref<32x128xf32, #tpu.memory_space<vmem>>, %arg3: memref<1x128xf32, #tpu.memory_space<vmem>>, %arg4: memref<16x1xi32, #tpu.memory_space<vmem>>, %arg5: memref<16x128xf32, #tpu.memory_space<vmem>>) attributes {dimension_semantics = [#tpu.dimension_semantics<parallel>], iteration_bounds = array<i64: 1>, scalar_prefetch = 0 : i64, scratch_operands = 0 : i64, tpu.core_type = #tpu.core_type<tc>, window_params = [{transform_indices = @transform_0, window_bounds = array<i64: 16, 32>}, {pipeline_mode = #tpu.pipeline_mode<synchronous>, transform_indices = @transform_1, window_bounds = array<i64: 32, 128>}, {pipeline_mode = #tpu.pipeline_mode<synchronous>, transform_indices = @transform_2, window_bounds = array<i64: 1, 128>}, {transform_indices = @transform_3, window_bounds = array<i64: 16, 1>}, {transform_indices = @transform_4, window_bounds = array<i64: 16, 128>}]} {
    %c0 = arith.constant 0 : index
    %c0_0 = arith.constant 0 : index
    %0 = vector.load %arg1[%c0, %c0_0] : memref<16x32xf32, #tpu.memory_space<vmem>>, vector<16x32xf32>
    %c0_1 = arith.constant 0 : index
    %c0_2 = arith.constant 0 : index
    %1 = vector.load %arg2[%c0_1, %c0_2] : memref<32x128xf32, #tpu.memory_space<vmem>>, vector<32x128xf32>
    %cst = arith.constant dense<0.000000e+00> : vector<16x128xf32>
    %2 = tpu.matmul %0, %1, %cst {dimension_numbers = #tpu.dot_dimension_numbers<[1], [0], [0], [1], [0, 0, 1, 1], [], []>} : vector<16x32xf32>, vector<32x128xf32>, vector<16x128xf32> -> vector<16x128xf32>
    %c0_3 = arith.constant 0 : index
    %c0_4 = arith.constant 0 : index
    %3 = vector.load %arg3[%c0_3, %c0_4] : memref<1x128xf32, #tpu.memory_space<vmem>>, vector<1x128xf32>
    %4 = vector.broadcast %3 : vector<1x128xf32> to vector<16x128xf32>
    %5 = arith.addf %2, %4 : vector<16x128xf32>
    %6 = tpu.iota {dimensions = array<i32: 1>} : vector<16x128xi32>
    %c8_i32 = arith.constant 8 : i32
    %7 = vector.broadcast %c8_i32 : i32 to vector<16x128xi32>
    %8 = arith.cmpi slt, %6, %7 : vector<16x128xi32>
    %c32_i32 = arith.constant 32 : i32
    %9 = vector.broadcast %c32_i32 : i32 to vector<16x128xi32>
    %10 = arith.cmpi sge, %6, %9 : vector<16x128xi32>
    %c34_i32 = arith.constant 34 : i32
    %11 = vector.broadcast %c34_i32 : i32 to vector<16x128xi32>
    %12 = arith.cmpi slt, %6, %11 : vector<16x128xi32>
    %13 = arith.andi %10, %12 : vector<16x128xi1>
    %14 = arith.ori %8, %13 : vector<16x128xi1>
    %c8_i32_5 = arith.constant 8 : i32
    %15 = vector.broadcast %c8_i32_5 : i32 to vector<16x128xi32>
    %16 = arith.cmpi sge, %6, %15 : vector<16x128xi32>
    %c16_i32 = arith.constant 16 : i32
    %17 = vector.broadcast %c16_i32 : i32 to vector<16x128xi32>
    %18 = arith.cmpi slt, %6, %17 : vector<16x128xi32>
    %19 = arith.andi %16, %18 : vector<16x128xi1>
    %c16_i32_6 = arith.constant 16 : i32
    %20 = vector.broadcast %c16_i32_6 : i32 to vector<16x128xi32>
    %21 = arith.cmpi sge, %6, %20 : vector<16x128xi32>
    %c32_i32_7 = arith.constant 32 : i32
    %22 = vector.broadcast %c32_i32_7 : i32 to vector<16x128xi32>
    %23 = arith.cmpi slt, %6, %22 : vector<16x128xi32>
    %24 = arith.andi %21, %23 : vector<16x128xi1>
    %cst_8 = arith.constant -1.000000e+30 : f32
    %25 = vector.broadcast %cst_8 : f32 to vector<16x128xf32>
    %26 = arith.select %14, %5, %25 : vector<16x128xi1>, vector<16x128xf32>
    %cst_9 = arith.constant dense<0xFF800000> : vector<16xf32>
    %27 = vector.multi_reduction <maximumf>, %26, %cst_9 [1] : vector<16x128xf32> to vector<16xf32>
    %28 = vector.shape_cast %27 : vector<16xf32> to vector<16x1xf32>
    %cst_10 = arith.constant -1.000000e+30 : f32
    %29 = vector.broadcast %cst_10 : f32 to vector<16x128xf32>
    %30 = arith.select %19, %5, %29 : vector<16x128xi1>, vector<16x128xf32>
    %cst_11 = arith.constant dense<0xFF800000> : vector<16xf32>
    %31 = vector.multi_reduction <maximumf>, %30, %cst_11 [1] : vector<16x128xf32> to vector<16xf32>
    %32 = vector.shape_cast %31 : vector<16xf32> to vector<16x1xf32>
    %cst_12 = arith.constant -1.000000e+30 : f32
    %33 = vector.broadcast %cst_12 : f32 to vector<16x128xf32>
    %34 = arith.select %24, %5, %33 : vector<16x128xi1>, vector<16x128xf32>
    %cst_13 = arith.constant dense<0xFF800000> : vector<16xf32>
    %35 = vector.multi_reduction <maximumf>, %34, %cst_13 [1] : vector<16x128xf32> to vector<16xf32>
    %36 = vector.shape_cast %35 : vector<16xf32> to vector<16x1xf32>
    %cst_14 = arith.constant 0.000000e+00 : f32
    %37 = vector.shape_cast %28 : vector<16x1xf32> to vector<16x1xf32>
    %38 = vector.broadcast %37 : vector<16x1xf32> to vector<16x128xf32>
    %39 = vector.broadcast %cst_14 : f32 to vector<16x128xf32>
    %40 = arith.select %14, %38, %39 : vector<16x128xi1>, vector<16x128xf32>
    %41 = vector.shape_cast %32 : vector<16x1xf32> to vector<16x1xf32>
    %42 = vector.broadcast %41 : vector<16x1xf32> to vector<16x128xf32>
    %43 = arith.select %19, %42, %40 : vector<16x128xi1>, vector<16x128xf32>
    %44 = vector.shape_cast %36 : vector<16x1xf32> to vector<16x1xf32>
    %45 = vector.broadcast %44 : vector<16x1xf32> to vector<16x128xf32>
    %46 = arith.select %24, %45, %43 : vector<16x128xi1>, vector<16x128xf32>
    %47 = arith.subf %5, %46 : vector<16x128xf32>
    %48 = math.exp %47 : vector<16x128xf32>
    %cst_15 = arith.constant 0.000000e+00 : f32
    %49 = vector.broadcast %cst_15 : f32 to vector<16x128xf32>
    %50 = arith.select %14, %48, %49 : vector<16x128xi1>, vector<16x128xf32>
    %cst_16 = arith.constant dense<0.000000e+00> : vector<16xf32>
    %51 = vector.multi_reduction <add>, %50, %cst_16 [1] : vector<16x128xf32> to vector<16xf32>
    %52 = vector.shape_cast %51 : vector<16xf32> to vector<16x1xf32>
    %53 = math.log %52 : vector<16x1xf32>
    %54 = arith.addf %28, %53 : vector<16x1xf32>
    %c0_17 = arith.constant 0 : index
    %c0_18 = arith.constant 0 : index
    %55 = vector.load %arg4[%c0_17, %c0_18] : memref<16x1xi32, #tpu.memory_space<vmem>>, vector<16x1xi32>
    %56 = vector.broadcast %55 : vector<16x1xi32> to vector<16x128xi32>
    %57 = arith.cmpi eq, %6, %56 : vector<16x128xi32>
    %cst_19 = arith.constant 0.000000e+00 : f32
    %58 = vector.broadcast %cst_19 : f32 to vector<16x128xf32>
    %59 = arith.select %57, %5, %58 : vector<16x128xi1>, vector<16x128xf32>
    %cst_20 = arith.constant dense<0.000000e+00> : vector<16xf32>
    %60 = vector.multi_reduction <add>, %59, %cst_20 [1] : vector<16x128xf32> to vector<16xf32>
    %61 = vector.shape_cast %60 : vector<16xf32> to vector<16x1xf32>
    %62 = arith.subf %61, %54 : vector<16x1xf32>
    %c8_i32_21 = arith.constant 8 : i32
    %63 = vector.broadcast %c8_i32_21 : i32 to vector<16x1xi32>
    %64 = arith.cmpi sge, %55, %63 : vector<16x1xi32>
    %c16_i32_22 = arith.constant 16 : i32
    %65 = vector.broadcast %c16_i32_22 : i32 to vector<16x1xi32>
    %66 = arith.cmpi slt, %55, %65 : vector<16x1xi32>
    %67 = arith.andi %64, %66 : vector<16x1xi1>
    %cst_23 = arith.constant 0.000000e+00 : f32
    %68 = vector.broadcast %cst_23 : f32 to vector<16x128xf32>
    %69 = arith.select %19, %48, %68 : vector<16x128xi1>, vector<16x128xf32>
    %cst_24 = arith.constant dense<0.000000e+00> : vector<16xf32>
    %70 = vector.multi_reduction <add>, %69, %cst_24 [1] : vector<16x128xf32> to vector<16xf32>
    %71 = vector.shape_cast %70 : vector<16xf32> to vector<16x1xf32>
    %72 = math.log %71 : vector<16x1xf32>
    %73 = arith.addf %32, %72 : vector<16x1xf32>
    %74 = vector.extract_strided_slice %5 {offsets = [0, 33], sizes = [16, 1], strides = [1, 1]} : vector<16x128xf32> to vector<16x1xf32>
    %75 = arith.subf %74, %54 : vector<16x1xf32>
    %76 = arith.subf %61, %73 : vector<16x1xf32>
    %77 = arith.addf %75, %76 : vector<16x1xf32>
    %78 = arith.select %67, %77, %62 : vector<16x1xi1>, vector<16x1xf32>
    %c16_i32_25 = arith.constant 16 : i32
    %79 = vector.broadcast %c16_i32_25 : i32 to vector<16x1xi32>
    %80 = arith.cmpi sge, %55, %79 : vector<16x1xi32>
    %c32_i32_26 = arith.constant 32 : i32
    %81 = vector.broadcast %c32_i32_26 : i32 to vector<16x1xi32>
    %82 = arith.cmpi slt, %55, %81 : vector<16x1xi32>
    %83 = arith.andi %80, %82 : vector<16x1xi1>
    %cst_27 = arith.constant 0.000000e+00 : f32
    %84 = vector.broadcast %cst_27 : f32 to vector<16x128xf32>
    %85 = arith.select %24, %48, %84 : vector<16x128xi1>, vector<16x128xf32>
    %cst_28 = arith.constant dense<0.000000e+00> : vector<16xf32>
    %86 = vector.multi_reduction <add>, %85, %cst_28 [1] : vector<16x128xf32> to vector<16xf32>
    %87 = vector.shape_cast %86 : vector<16xf32> to vector<16x1xf32>
    %88 = math.log %87 : vector<16x1xf32>
    %89 = arith.addf %36, %88 : vector<16x1xf32>
    %90 = vector.extract_strided_slice %5 {offsets = [0, 32], sizes = [16, 1], strides = [1, 1]} : vector<16x128xf32> to vector<16x1xf32>
    %91 = arith.subf %90, %54 : vector<16x1xf32>
    %92 = arith.subf %61, %89 : vector<16x1xf32>
    %93 = arith.addf %91, %92 : vector<16x1xf32>
    %94 = arith.select %83, %93, %78 : vector<16x1xi1>, vector<16x1xf32>
    %cst_29 = arith.constant 0.000000e+00 : f32
    %95 = vector.broadcast %cst_29 : f32 to vector<16x1xf32>
    %96 = arith.subf %95, %94 : vector<16x1xf32>
    %97 = vector.shape_cast %96 : vector<16x1xf32> to vector<16x1xf32>
    %98 = vector.broadcast %97 : vector<16x1xf32> to vector<16x128xf32>
    %c0_30 = arith.constant 0 : index
    %c0_31 = arith.constant 0 : index
    %99 = vector.load %arg5[%c0_30, %c0_31] : memref<16x128xf32, #tpu.memory_space<vmem>>, vector<16x128xf32>
    tpu.vector_store %arg5[%c0_30, %c0_31], %98 {strides = array<i32>} : memref<16x128xf32, #tpu.memory_space<vmem>>, vector<16x128xf32>,
    return
  }
  func.func @transform_0(%arg0: i32) -> (i32, i32) {
    %c0_i32 = arith.constant 0 : i32
    %c0_i32_0 = arith.constant 0 : i32
    return %arg0, %c0_i32 : i32, i32
  }
  func.func @transform_1(%arg0: i32) -> (i32, i32) {
    %c0_i32 = arith.constant 0 : i32
    %c0_i32_0 = arith.constant 0 : i32
    %c0_i32_1 = arith.constant 0 : i32
    return %c0_i32, %c0_i32_0 : i32, i32
  }
  func.func @transform_2(%arg0: i32) -> (i32, i32) {
    %c0_i32 = arith.constant 0 : i32
    %c0_i32_0 = arith.constant 0 : i32
    %c0_i32_1 = arith.constant 0 : i32
    return %c0_i32, %c0_i32_0 : i32, i32
  }
  func.func @transform_3(%arg0: i32) -> (i32, i32) {
    %c0_i32 = arith.constant 0 : i32
    %c0_i32_0 = arith.constant 0 : i32
    return %arg0, %c0_i32 : i32, i32
  }
  func.func @transform_4(%arg0: i32) -> (i32, i32) {
    %c0_i32 = arith.constant 0 : i32
    %c0_i32_0 = arith.constant 0 : i32
    return %arg0, %c0_i32 : i32, i32
  }
}

</mosaic_0001>

<llo_original>
// kernel: tpu_custom_call.1
$region0: #{tpu_custom_call.1}
  #allocation0 [shape = 'u32[]', space=smem, size = 0x4, offset = 0x4, fixed_abs, tag = 'smem constant byte address 0x4 - core index']
  #allocation1 [shape = 'u32[144,128]{1,0:T(1,128)}', space=vmem, size = 0x12000, scoped, tag = 'internal scratch']
  %s0 = inlined_call_operand.vmem [shape: f32[16,32], index: 0, kind: input, shape index: {}]
  %s1 = inlined_call_operand.hbm [shape: f32[32,128], index: 1, kind: input, shape index: {}]
  %s2 = inlined_call_operand.vmem [shape: f32[1,128], index: 2, kind: input, shape index: {}]
  %s3 = inlined_call_operand.vmem [shape: s32[16,1], index: 3, kind: input, shape index: {}]
  %s4 = inlined_call_operand.hbm [shape: f32[16,128], index: 4, kind: output, shape index: {}]
  %s5 = sld [smem:[#allocation0]]
  $region30: #{tpu_custom_call.1} parent=0
    _
  %s7 = ssub.s32 1, %s5
  %s8 = scalar_select 0, %s7, %s5
  $region1: #{tpu_custom_call.1} parent=0
    #allocation2 [shape = 'u8[16384]{0}', space=vmem, size = 0x4000, scoped, tag = 'input window, operand 1, single buffered']
    #allocation3 [shape = 's32[1]{0}', space=sflag, size = 0x4, scoped, tag = 'scoped memory for tpu_custom_call.1']
    #allocation4 [shape = 's32[1]{0}', space=sflag, size = 0x4, scoped, tag = 'scoped memory for tpu_custom_call.1']
    #allocation5 [shape = 'u8[8192]{0}', space=vmem, size = 0x2000, scoped, tag = 'output window, operand 0, single buffered']
    %9 = vsyncpa [#allocation3], 0
    %10 = vsyncpa [#allocation4], 0
    // Predicated region
    $region2: #{tpu_custom_call.1} parent=1 // pred_check
      _
    $region3: #{tpu_custom_call.1} parent=1 // pred_check_branch
      %12 = sbr.rel (0) target = $region5
    $region4: #{tpu_custom_call.1} parent=1 // pred_region
      _
    $region5: #{tpu_custom_call.1} parent=1 // pred_fallthru
      _
    // Predicated region
    $region6: #{tpu_custom_call.1} parent=1 // pred_check
      _
    $region7: #{tpu_custom_call.1} parent=1 // pred_check_branch
      %14 = sbr.rel (0) target = $region9
    $region8: #{tpu_custom_call.1} parent=1 // pred_region
      %s16 = ssub.s32 512, 512
      %17 = vsyncadd [#allocation3], %s16
      %s18 = sshll.u32 [#allocation2], 4
      %s19 = int_to_ptr.vmem [resolvable:$true] %s18
      %24 = dma.hbm_to_vmem [thread:$0]  %s1, 512, %s19, [#allocation3], 128, 128, 8
    $region9: #{tpu_custom_call.1} parent=1 // pred_fallthru
      _
    // Predicated region
    $region10: #{tpu_custom_call.1} parent=1 // pred_check
      _
    $region11: #{tpu_custom_call.1} parent=1 // pred_check_branch
      %26 = sbr.rel (0) target = $region13
    $region12: #{tpu_custom_call.1} parent=1 // pred_region
      _
    $region13: #{tpu_custom_call.1} parent=1 // pred_fallthru
      _
    // Predicated region
    $region14: #{tpu_custom_call.1} parent=1 // pred_check
      _
    $region15: #{tpu_custom_call.1} parent=1 // pred_check_branch
      %28 = sbr.rel (0) target = $region17
    $region16: #{tpu_custom_call.1} parent=1 // pred_region
      _
    $region17: #{tpu_custom_call.1} parent=1 // pred_fallthru
      _
    // Predicated region
    $region18: #{tpu_custom_call.1} parent=1 // pred_check
      _
    $region19: #{tpu_custom_call.1} parent=1 // pred_check_branch
      %30 = sbr.rel (0) target = $region21
    $region20: #{tpu_custom_call.1} parent=1 // pred_region
      %31 = dma.done [#allocation3], 512
    $region21: #{tpu_custom_call.1} parent=1 // pred_fallthru
      _
    %v32 = vld [vmem:[%s0] sm:$0xff]
    %v33 = vld [vmem:[%s0 + $0x8] sm:$0xff]
    %v34 = vld [vmem:[#allocation2] sm:$0xff]
    %v35 = vld [vmem:[#allocation2 + $0x8] sm:$0xff]
    %v36 = vld [vmem:[#allocation2 + $0x10] sm:$0xff]
    %v37 = vld [vmem:[#allocation2 + $0x18] sm:$0xff]
    %v38 = vld [vmem:[%s2] sm:$0x1]
    %v40 = vlaneseq
    %v41 = vshrl.u32 %v40, 7
    %v42 = vsub.s32 0, %v41
    %v43 = vrot.slane %v38, %v42
    %vm45 = vcmask 261120
    %v47 = vsel %vm45, %v32, 0
    %v50 = vsel %vm45, %v33, 0
    %52 = vmatprep.subr.mxu0 0.0
    %53 = vmatpush1.msra.mxu0 %v34
    %54 = vmatprep.subr.mxu0 0.0
    %55 = vmatpush1.msra.mxu0 %v35
    %56 = vmatprep.subr.mxu0 0.0
    %57 = vmatpush1.msra.mxu0 %v36
    %58 = vmatprep.subr.mxu0 0.0
    %59 = vmatpush1.msra.mxu0 %v37
    %60 = vmatprep.subr.mxu0 0.0
    %61 = vmatpush1.msra.mxu0 0.0
    %62 = vmatprep.subr.mxu0 0.0
    %63 = vmatpush1.msra.mxu0 0.0
    %64 = vmatprep.subr.mxu0 0.0
    %65 = vmatpush1.msra.mxu0 0.0
    %66 = vmatprep.subr.mxu0 0.0
    %67 = vmatpush1.msra.mxu0 0.0
    %68 = vmatprep.subr.mxu0 0.0
    %69 = vmatpush1.msra.mxu0 0.0
    %70 = vmatprep.subr.mxu0 0.0
    %71 = vmatpush1.msra.mxu0 0.0
    %72 = vmatprep.subr.mxu0 0.0
    %73 = vmatpush1.msra.mxu0 0.0
    %74 = vmatprep.subr.mxu0 0.0
    %75 = vmatpush1.msra.mxu0 0.0
    %76 = vmatprep.subr.mxu0 0.0
    %77 = vmatpush1.msra.mxu0 0.0
    %78 = vmatprep.subr.mxu0 0.0
    %79 = vmatpush1.msra.mxu0 0.0
    %80 = vmatprep.subr.mxu0 0.0
    %81 = vmatpush1.msra.mxu0 0.0
    %82 = vmatprep.subr.mxu0 0.0
    %83 = vmatpush1.msra.mxu0 0.0
    %84 = vmatprep.subr.mxu0 0.0
    %85 = vmatpush1.msra.mxu0 0.0
    %86 = vmatprep.subr.mxu0 0.0
    %87 = vmatpush1.msra.mxu0 0.0
    %88 = vmatprep.subr.mxu0 0.0
    %89 = vmatpush1.msra.mxu0 0.0
    %90 = vmatprep.subr.mxu0 0.0
    %91 = vmatpush1.msra.mxu0 0.0
    %92 = vmatprep.subr.mxu0 0.0
    %93 = vmatpush1.msra.mxu0 0.0
    %94 = vmatprep.subr.mxu0 0.0
    %95 = vmatpush1.msra.mxu0 0.0
    %96 = vmatprep.subr.mxu0 0.0
    %97 = vmatpush1.msra.mxu0 0.0
    %98 = vmatprep.subr.mxu0 0.0
    %99 = vmatpush1.msra.mxu0 0.0
    %100 = vmatprep.subr.mxu0 0.0
    %101 = vmatpush1.msra.mxu0 0.0
    %102 = vmatprep.subr.mxu0 0.0
    %103 = vmatpush1.msra.mxu0 0.0
    %104 = vmatprep.subr.mxu0 0.0
    %105 = vmatpush1.msra.mxu0 0.0
    %106 = vmatprep.subr.mxu0 0.0
    %107 = vmatpush1.msra.mxu0 0.0
    %108 = vmatprep.subr.mxu0 0.0
    %109 = vmatpush1.msra.mxu0 0.0
    %110 = vmatprep.subr.mxu0 0.0
    %111 = vmatpush1.msra.mxu0 0.0
    %112 = vmatprep.subr.mxu0 0.0
    %113 = vmatpush1.msra.mxu0 0.0
    %114 = vmatprep.subr.mxu0 0.0
    %115 = vmatpush1.msra.mxu0 0.0
    %116 = vmatprep.mubr.f32.mxu0 0.0
    %117 = vmatmul.mubr.f32.gmra.mrb[0].mxu0 %v47
    %v118 = vpop.f32.mrb[0].mxu0
    %v119 = vadd.f32 %v43, %v118
    %v120 = vpop.f32.mrb[0].mxu0
    %121 = vmatprep.mubr.f32.mxu0 0.0
    %122 = vmatmul.mubr.f32.gmra.mrb[0].mxu0 %v50
    %v123 = vpop.f32.mrb[0].mxu0
    %v124 = vadd.f32 %v43, %v123
    %v125 = vpop.f32.mrb[0].mxu0
    %126 = vdwg.mxu0
    %v127 = vlaneseq
    %v128 = vand.u32 %v127, 127
    %vm129 = vcmp.lt.s32.totalorder %v128, 8
    %vm130 = vcmp.ge.s32.totalorder %v128, 32
    %vm131 = vcmp.lt.s32.totalorder %v128, 34
    %vm132 = vmand %vm130, %vm131
    %vm133 = vmor %vm129, %vm132
    %vm134 = vcmp.ge.s32.totalorder %v128, 8
    %vm135 = vcmp.lt.s32.totalorder %v128, 16
    %vm136 = vmand %vm134, %vm135
    %vm137 = vcmp.ge.s32.totalorder %v128, 16
    %vm138 = vcmp.lt.s32.totalorder %v128, 32
    %vm139 = vmand %vm137, %vm138
    %v140 = vsel %vm133, %v119, -1e+30
    %v141 = vsel %vm133, %v124, -1e+30
    %142 = vmax.xlane.f32.xlu0 %v140
    %v143 = vpop.xlane.xlu0 %142
    %144 = vmax.xlane.f32.xlu0 %v141
    %v145 = vpop.xlane.xlu0 %144
    %v146 = vsel %vm136, %v119, -1e+30
    %v147 = vsel %vm136, %v124, -1e+30
    %148 = vmax.xlane.f32.xlu0 %v146
    %v149 = vpop.xlane.xlu0 %148
    %150 = vmax.xlane.f32.xlu0 %v147
    %v151 = vpop.xlane.xlu0 %150
    %v152 = vsel %vm139, %v119, -1e+30
    %v153 = vsel %vm139, %v124, -1e+30
    %154 = vmax.xlane.f32.xlu0 %v152
    %v155 = vpop.xlane.xlu0 %154
    %156 = vmax.xlane.f32.xlu0 %v153
    %v157 = vpop.xlane.xlu0 %156
    %v158 = vsel %vm133, %v143, 0.0
    %v159 = vsel %vm133, %v145, 0.0
    %v160 = vsel %vm136, %v149, %v158
    %v161 = vsel %vm136, %v151, %v159
    %v162 = vsel %vm139, %v155, %v160
    %v163 = vsel %vm139, %v157, %v161
    %v164 = vsub.f32 %v119, %v162
    %v165 = vsub.f32 %v124, %v163
    %v166 = vmul.f32 %v164, 1.442695
    %v167 = vpow.pop %v166
    %v168 = vmul.f32 %v165, 1.442695
    %v169 = vpow.pop %v168
    %v170 = vsel %vm133, %v167, 0.0
    %v171 = vsel %vm133, %v169, 0.0
    %172 = vadd.xlane.f32.xlu0 %v170
    %v173 = vpop.xlane.xlu0 %172
    %174 = vadd.xlane.f32.xlu0 %v171
    %v175 = vpop.xlane.xlu0 %174
    %v176 = vlog2.pop %v173
    %v177 = vmul.f32 %v176, 0.6931472
    %v178 = vlog2.pop %v175
    %v179 = vmul.f32 %v178, 0.6931472
    %v180 = vadd.f32 %v143, %v177
    %v181 = vadd.f32 %v145, %v179
    %v182 = vld [vmem:[%s3] sm:$0xff]
    %v183 = vld [vmem:[%s3 + $0x8] sm:$0xff]
    %184 = vset.pattern.permute.xlu0 0
    %185 = vperm.xlu0 %184, %v182
    %v186 = vpop.permute.xlu0 %185
    %187 = vset.pattern.permute.xlu0 0
    %188 = vperm.xlu0 %187, %v183
    %v189 = vpop.permute.xlu0 %188
    %vm190 = vcmp.eq.s32.totalorder %v128, %v186
    %vm191 = vcmp.eq.s32.totalorder %v128, %v189
    %v192 = vsel %vm190, %v119, 0.0
    %v193 = vsel %vm191, %v124, 0.0
    %194 = vadd.xlane.f32.xlu0 %v192
    %v195 = vpop.xlane.xlu0 %194
    %196 = vadd.xlane.f32.xlu0 %v193
    %v197 = vpop.xlane.xlu0 %196
    %v198 = vsub.f32 %v195, %v180
    %v199 = vsub.f32 %v197, %v181
    %vm200 = vcmp.ge.s32.totalorder %v182, 8
    %vm201 = vcmp.ge.s32.totalorder %v183, 8
    %vm202 = vcmp.lt.s32.totalorder %v182, 16
    %vm203 = vcmp.lt.s32.totalorder %v183, 16
    %vm204 = vmand %vm200, %vm202
    %vm205 = vmand %vm201, %vm203
    %v206 = vsel %vm136, %v167, 0.0
    %v207 = vsel %vm136, %v169, 0.0
    %208 = vadd.xlane.f32.xlu0 %v206
    %v209 = vpop.xlane.xlu0 %208
    %210 = vadd.xlane.f32.xlu0 %v207
    %v211 = vpop.xlane.xlu0 %210
    %v212 = vlog2.pop %v209
    %v213 = vmul.f32 %v212, 0.6931472
    %v214 = vlog2.pop %v211
    %v215 = vmul.f32 %v214, 0.6931472
    %v216 = vadd.f32 %v149, %v213
    %v217 = vadd.f32 %v151, %v215
    %v218 = vsub.f32 %v119, %v180
    %v219 = vsub.f32 %v124, %v181
    %v220 = vsub.f32 %v195, %v216
    %v221 = vsub.f32 %v197, %v217
    %v222 = vadd.f32 %v218, %v220
    %v223 = vadd.f32 %v219, %v221
    %226 = vrot.lane.b32.xlu0 %v222, 95
    %v227 = vpop.permute.xlu0 %226
    %228 = vrot.lane.b32.xlu0 %v223, 95
    %v229 = vpop.permute.xlu0 %228
    %v232 = vsel %vm204, %v227, %v198
    %v233 = vsel %vm205, %v229, %v199
    %vm234 = vcmp.ge.s32.totalorder %v182, 16
    %vm235 = vcmp.ge.s32.totalorder %v183, 16
    %vm236 = vcmp.lt.s32.totalorder %v182, 32
    %vm237 = vcmp.lt.s32.totalorder %v183, 32
    %vm238 = vmand %vm234, %vm236
    %vm239 = vmand %vm235, %vm237
    %v240 = vsel %vm139, %v167, 0.0
    %v241 = vsel %vm139, %v169, 0.0
    %242 = vadd.xlane.f32.xlu0 %v240
    %v243 = vpop.xlane.xlu0 %242
    %244 = vadd.xlane.f32.xlu0 %v241
    %v245 = vpop.xlane.xlu0 %244
    %v246 = vlog2.pop %v243
    %v247 = vmul.f32 %v246, 0.6931472
    %v248 = vlog2.pop %v245
    %v249 = vmul.f32 %v248, 0.6931472
    %v250 = vadd.f32 %v155, %v247
    %v251 = vadd.f32 %v157, %v249
    %v252 = vsub.f32 %v195, %v250
    %v253 = vsub.f32 %v197, %v251
    %v254 = vadd.f32 %v218, %v252
    %v255 = vadd.f32 %v219, %v253
    %258 = vrot.lane.b32.xlu0 %v254, 96
    %v259 = vpop.permute.xlu0 %258
    %260 = vrot.lane.b32.xlu0 %v255, 96
    %v261 = vpop.permute.xlu0 %260
    %v264 = vsel %vm238, %v259, %v232
    %v265 = vsel %vm239, %v261, %v233
    %v266 = vsub.f32 0.0, %v264
    %v267 = vsub.f32 0.0, %v265
    %269 = vset.pattern.permute.xlu0 0
    %270 = vperm.xlu0 %269, %v266
    %v271 = vpop.permute.xlu0 %270
    %274 = vset.pattern.permute.xlu0 0
    %275 = vperm.xlu0 %274, %v267
    %v276 = vpop.permute.xlu0 %275
    %278 = vst [vmem:[#allocation5] sm:$0xff] %v271
    %279 = vst [vmem:[#allocation5 + $0x8] sm:$0xff] %v276
    // Predicated region
    $region22: #{tpu_custom_call.1} parent=1 // pred_check
      _
    $region23: #{tpu_custom_call.1} parent=1 // pred_check_branch
      %281 = sbr.rel (0) target = $region25
    $region24: #{tpu_custom_call.1} parent=1 // pred_region
      %s283 = ssub.s32 256, 256
      %284 = vsyncadd [#allocation4], %s283
      %s285 = sshll.u32 [#allocation5], 4
      %s286 = int_to_ptr.vmem [resolvable:$true] %s285
      %291 = dma.vmem_to_hbm [thread:$0]  %s286, 256, %s4, [#allocation4], 128, 128, 8
    $region25: #{tpu_custom_call.1} parent=1 // pred_fallthru
      _
    // Predicated region
    $region26: #{tpu_custom_call.1} parent=1 // pred_check
      _
    $region27: #{tpu_custom_call.1} parent=1 // pred_check_branch
      %293 = sbr.rel (0) target = $region29
    $region28: #{tpu_custom_call.1} parent=1 // pred_region
      %294 = dma.done [#allocation4], 256
    $region29: #{tpu_custom_call.1} parent=1 // pred_fallthru
      _
    %295 = vsyncpa [#allocation3], 1
    %296 = vsyncpa [#allocation4], 1

</llo_original>
